<compile_context>
chip_gen: v7x
topology: tpu7x:2x2x1
jax: 0.10.0
libtpu: 0.0.40
codegen_flags: <defaults>
</compile_context>

<pallas_src>
import functools

import jax
import jax.numpy as jnp
from jax.experimental import pallas as pl
from jax.experimental.pallas import tpu as pltpu


def _cdiv(a, b):
    return -(-a // b)


def _round_up(a, m):
    return _cdiv(a, m) * m


def _sublanes(dtype):
    # Native sublane tile: 8 (fp32) / 16 (bf16) / 32 (int8, fp8).
    return max(8, 32 // jnp.dtype(dtype).itemsize)


def _vmem_capacity_bytes():
    """Per-core VMEM capacity (v5e/v6e 128 MiB, v7x 64 MiB), with fallbacks."""
    try:
        cap = int(pltpu.get_tpu_info().vmem_capacity_bytes)
        if cap > 0:
            return cap
    except Exception:
        pass
    try:
        kind = jax.devices()[0].device_kind.lower()
    except Exception:
        kind = ""
    if "v7" in kind:
        return 64 * 1024 * 1024
    if "v5" in kind or "v6" in kind:
        return 128 * 1024 * 1024
    return 64 * 1024 * 1024  # unknown generation: stay conservative


def _rmsnorm_gated_kernel(*refs, group_size, eps, gated, input_dtype, mul_dtype):
    if gated:
        x_ref, g_ref, w_ref, o_ref = refs
    else:
        x_ref, w_ref, o_ref = refs

    # fp32 normalization, exactly like the torch module.
    x = x_ref[...].astype(jnp.float32)
    if gated:
        g = g_ref[...].astype(jnp.float32)
        x = x * (g * jax.nn.sigmoid(g))          # silu(gate); sigmoid -> EUP slot

    tm, hidden = x.shape
    if group_size == hidden:
        var = jnp.mean(x * x, axis=-1, keepdims=True)
        x = x * jax.lax.rsqrt(var + eps)
    else:
        gcount = hidden // group_size
        xg = x.reshape(tm, gcount, group_size)
        var = jnp.mean(xg * xg, axis=-1, keepdims=True)
        xg = xg * jax.lax.rsqrt(var + eps)
        x = xg.reshape(tm, hidden)

    # Torch: weight * hidden_states.to(input_dtype)  (round BEFORE the multiply).
    x = x.astype(input_dtype)
    out = w_ref[...].astype(mul_dtype) * x.astype(mul_dtype)
    o_ref[...] = out.astype(o_ref.dtype)


def gfr2_rmsnorm_gated(hidden_states, weight, gate=None, *, group_size,
                       eps=1e-6, block_rows=None, out_dtype=None):
    """Grouped, gated RMSNorm matching GFR2RMSNormGated.forward.

    hidden_states: (..., hidden_size)
    weight:        (hidden_size,)
    gate:          optional, same shape as hidden_states (dtype may differ)
    out_dtype:     optional override (e.g. jnp.bfloat16) to cut HBM writeback
                   traffic; the default keeps torch promotion semantics.
    """
    orig_shape = hidden_states.shape
    input_dtype = hidden_states.dtype
    hidden = int(orig_shape[-1])
    if hidden % group_size != 0:
        raise ValueError(f"hidden ({hidden}) must be divisible by group_size ({group_size})")

    rows = 1
    for d in orig_shape[:-1]:
        rows *= int(d)
    rows = max(rows, 1)

    x2d = hidden_states.reshape(rows, hidden)
    w2d = weight.reshape(1, hidden)
    gated = gate is not None
    g2d = gate.reshape(rows, hidden) if gated else None

    # torch promotion semantics: weight * x.to(input_dtype)
    mul_dtype = jnp.promote_types(weight.dtype, input_dtype)
    if out_dtype is None:
        out_dtype = mul_dtype

    in_bytes = jnp.dtype(input_dtype).itemsize
    gate_bytes = jnp.dtype(g2d.dtype).itemsize if gated else 0
    out_bytes = jnp.dtype(out_dtype).itemsize
    w_bytes = jnp.dtype(weight.dtype).itemsize

    sub = max(_sublanes(input_dtype), _sublanes(out_dtype),
              _sublanes(g2d.dtype) if gated else 8)

    # Generation-aware VMEM budget, ~20% headroom below physical.
    vmem_cap = _vmem_capacity_bytes()
    vmem_limit = int(vmem_cap * 0.8)

    # Per-row footprint: double-buffered in/gate/out streams + fp32 temporaries
    # held live in the kernel body.  No extra safety divisor (don't hedge twice).
    per_row_stream = hidden * (in_bytes + gate_bytes + out_bytes)
    n_f32_tmp = 3 if gated else 2
    per_row_vmem = hidden * (2 * (in_bytes + gate_bytes + out_bytes) + n_f32_tmp * 4)
    fixed_vmem = 4 * hidden * w_bytes            # resident weight block (+ slack)
    target_step_bytes = 16 * 1024 * 1024         # keep 0.35us/step overhead <~5%

    max_tm = _round_up(rows, sub)
    if block_rows is not None:
        tm = min(max(sub, (int(block_rows) // sub) * sub), max_tm)
    else:
        tm = (vmem_limit - fixed_vmem) // max(per_row_vmem, 1)
        # Bandwidth-aware cap instead of a fixed row cap.
        tm = min(tm, max(target_step_bytes // max(per_row_stream, 1), sub))
        tm = min(max(sub, (tm // sub) * sub), max_tm)

        # Megacore / pipelining: aim for >= 8 grid steps (>= 4 per TC on v7x)
        # and a best-effort even step count so neither core idles a whole step.
        steps = _cdiv(rows, tm)
        max_steps = max(1, _cdiv(rows, sub))
        desired = max(steps, min(8, max_steps))
        if desired > 1 and desired % 2 == 1:
            desired = min(desired + 1, max_steps)
        if desired != steps:
            tm = min(max(sub, _round_up(_cdiv(rows, desired), sub)), max_tm)

    grid = (_cdiv(rows, tm),)                     # ragged tail -> partial block
    row_spec = pl.BlockSpec((tm, hidden), lambda i: (i, 0))
    w_spec = pl.BlockSpec((1, hidden), lambda i: (0, 0))

    kernel = functools.partial(
        _rmsnorm_gated_kernel,
        group_size=group_size, eps=eps, gated=gated,
        input_dtype=input_dtype, mul_dtype=mul_dtype)

    gcount = hidden // group_size
    n_in = 2 if gated else 1
    cost = pl.CostEstimate(
        flops=int(rows * hidden * (6 if gated else 3)),
        transcendentals=int(rows * (hidden if gated else 0) + rows * gcount),
        bytes_accessed=int(rows * per_row_stream + hidden * w_bytes),
    )

    inputs = (x2d, g2d, w2d) if gated else (x2d, w2d)
    in_specs = [row_spec] * n_in + [w_spec]

    out = pl.pallas_call(
        kernel,
        out_shape=jax.ShapeDtypeStruct((rows, hidden), out_dtype),
        grid=grid,
        in_specs=in_specs,
        out_specs=row_spec,
        compiler_params=pltpu.CompilerParams(
            dimension_semantics=("parallel",),
            vmem_limit_bytes=vmem_limit),
        cost_estimate=cost,
    )(*inputs)

    return out.reshape(orig_shape[:-1] + (hidden,))


def _reference(hidden_states, weight, gate, group_size, eps):
    """Pure-JAX mirror of the PyTorch forward (torch-exact dtype handling)."""
    input_dtype = hidden_states.dtype
    x = hidden_states.astype(jnp.float32)
    if gate is not None:
        g = gate.astype(jnp.float32)
        x = x * (g * jax.nn.sigmoid(g))
    *prefix, hidden = x.shape
    gcount = hidden // group_size
    xg = x.reshape(*prefix, gcount, group_size)
    var = jnp.mean(xg * xg, axis=-1, keepdims=True)
    xg = xg * jax.lax.rsqrt(var + eps)
    x = xg.reshape(*prefix, hidden)
    return weight * x.astype(input_dtype)


if __name__ == "__main__":
    eps = 1e-6
    key = jax.random.PRNGKey(0)
    k1, k2, k3, k4, k5 = jax.random.split(key, 5)

    # Test A: gated path, fp32, shapes consistent with the module's forward.
    batch, seq, hidden, group_size = 2, 8, 32, 16
    hidden_states = jax.random.normal(k1, (batch, seq, hidden), dtype=jnp.float32)
    gate = jax.random.normal(k2, (batch, seq, hidden), dtype=jnp.float32)
    weight = jnp.ones((hidden,), dtype=jnp.float32)   # module init: ones

    out = gfr2_rmsnorm_gated(hidden_states, weight, gate,
                             group_size=group_size, eps=eps)
    out = jax.block_until_ready(out)
    ref = _reference(hidden_states, weight, gate, group_size, eps)
    assert out.shape == ref.shape and out.dtype == ref.dtype
    assert jnp.allclose(out, ref, atol=1e-5, rtol=1e-5), "gated mismatch"

    # Test B: ungated path + row count not divisible by the tile
    # (exercises the masked partial trailing block — no pad/slice copies).
    x_b = jax.random.normal(k3, (3, 5, hidden), dtype=jnp.float32)
    out_b = gfr2_rmsnorm_gated(x_b, weight, None,
                               group_size=group_size, eps=eps)
    out_b = jax.block_until_ready(out_b)
    ref_b = _reference(x_b, weight, None, group_size, eps)
    assert out_b.shape == ref_b.shape and out_b.dtype == ref_b.dtype
    assert jnp.allclose(out_b, ref_b, atol=1e-5, rtol=1e-5), "ungated mismatch"

    # Test C: bf16 activations/gate with fp32 weight (mixed-dtype promotion,
    # 16-sublane tiles, ragged rows).
    x_c = jax.random.normal(k4, (2, 9, hidden), dtype=jnp.bfloat16)
    g_c = jax.random.normal(k5, (2, 9, hidden), dtype=jnp.bfloat16)
    out_c = gfr2_rmsnorm_gated(x_c, weight, g_c,
                               group_size=group_size, eps=eps)
    out_c = jax.block_until_ready(out_c)
    ref_c = _reference(x_c, weight, g_c, group_size, eps)
    assert out_c.shape == ref_c.shape and out_c.dtype == ref_c.dtype
    assert jnp.allclose(out_c, ref_c, atol=1e-2, rtol=1e-2), "bf16 mismatch"

    print("KERNEL_OK")
</pallas_src>

<mosaic_0001>
module attributes {stable_mosaic.version = 11 : i64} {
  func.func @_rmsnorm_gated_kernel(%arg0: i32, %arg1: memref<8x32xf32, #tpu.memory_space<vmem>>, %arg2: memref<8x32xf32, #tpu.memory_space<vmem>>, %arg3: memref<1x32xf32, #tpu.memory_space<vmem>>, %arg4: memref<8x32xf32, #tpu.memory_space<vmem>>) attributes {dimension_semantics = [#tpu.dimension_semantics<parallel>], iteration_bounds = array<i64: 2>, scalar_prefetch = 0 : i64, scratch_operands = 0 : i64, tpu.core_type = #tpu.core_type<tc>, window_params = [{transform_indices = @transform_0, window_bounds = array<i64: 8, 32>}, {transform_indices = @transform_1, window_bounds = array<i64: 8, 32>}, {pipeline_mode = #tpu.pipeline_mode<synchronous>, transform_indices = @transform_2, window_bounds = array<i64: 1, 32>}, {transform_indices = @transform_3, window_bounds = array<i64: 8, 32>}]} {
    %c0 = arith.constant 0 : index
    %c0_0 = arith.constant 0 : index
    %0 = vector.load %arg1[%c0, %c0_0] : memref<8x32xf32, #tpu.memory_space<vmem>>, vector<8x32xf32>
    %c0_1 = arith.constant 0 : index
    %c0_2 = arith.constant 0 : index
    %1 = vector.load %arg2[%c0_1, %c0_2] : memref<8x32xf32, #tpu.memory_space<vmem>>, vector<8x32xf32>
    %2 = arith.negf %1 : vector<8x32xf32>
    %3 = math.exp %2 : vector<8x32xf32>
    %cst = arith.constant 1.000000e+00 : f32
    %4 = vector.broadcast %cst : f32 to vector<8x32xf32>
    %5 = arith.addf %4, %3 : vector<8x32xf32>
    %6 = arith.divf %4, %5 : vector<8x32xf32>
    %7 = arith.mulf %1, %6 : vector<8x32xf32>
    %8 = arith.mulf %0, %7 : vector<8x32xf32>
    %9 = vector.shape_cast %8 : vector<8x32xf32> to vector<8x2x16xf32>
    %10 = arith.mulf %9, %9 : vector<8x2x16xf32>
    %cst_3 = arith.constant dense<0.000000e+00> : vector<8x2xf32>
    %11 = vector.multi_reduction <add>, %10, %cst_3 [2] : vector<8x2x16xf32> to vector<8x2xf32>
    %12 = vector.shape_cast %11 : vector<8x2xf32> to vector<8x2x1xf32>
    %cst_4 = arith.constant 1.600000e+01 : f32
    %13 = vector.broadcast %cst_4 : f32 to vector<8x2x1xf32>
    %14 = arith.divf %12, %13 : vector<8x2x1xf32>
    %cst_5 = arith.constant 9.99999997E-7 : f32
    %15 = vector.broadcast %cst_5 : f32 to vector<8x2x1xf32>
    %16 = arith.addf %14, %15 : vector<8x2x1xf32>
    %17 = math.rsqrt %16 : vector<8x2x1xf32>
    %18 = vector.broadcast %17 : vector<8x2x1xf32> to vector<8x2x16xf32>
    %19 = arith.mulf %9, %18 : vector<8x2x16xf32>
    %20 = vector.shape_cast %19 : vector<8x2x16xf32> to vector<8x32xf32>
    %c0_6 = arith.constant 0 : index
    %c0_7 = arith.constant 0 : index
    %21 = vector.load %arg3[%c0_6, %c0_7] : memref<1x32xf32, #tpu.memory_space<vmem>>, vector<1x32xf32>
    %22 = vector.broadcast %21 : vector<1x32xf32> to vector<8x32xf32>
    %23 = arith.mulf %22, %20 : vector<8x32xf32>
    %c0_8 = arith.constant 0 : index
    %c0_9 = arith.constant 0 : index
    %24 = vector.load %arg4[%c0_8, %c0_9] : memref<8x32xf32, #tpu.memory_space<vmem>>, vector<8x32xf32>
    tpu.vector_store %arg4[%c0_8, %c0_9], %23 {strides = array<i32>} : memref<8x32xf32, #tpu.memory_space<vmem>>, vector<8x32xf32>,
    return
  }
  func.func @transform_0(%arg0: i32) -> (i32, i32) {
    %c0_i32 = arith.constant 0 : i32
    %c0_i32_0 = arith.constant 0 : i32
    return %arg0, %c0_i32 : i32, i32
  }
  func.func @transform_1(%arg0: i32) -> (i32, i32) {
    %c0_i32 = arith.constant 0 : i32
    %c0_i32_0 = arith.constant 0 : i32
    return %arg0, %c0_i32 : i32, i32
  }
  func.func @transform_2(%arg0: i32) -> (i32, i32) {
    %c0_i32 = arith.constant 0 : i32
    %c0_i32_0 = arith.constant 0 : i32
    %c0_i32_1 = arith.constant 0 : i32
    return %c0_i32, %c0_i32_0 : i32, i32
  }
  func.func @transform_3(%arg0: i32) -> (i32, i32) {
    %c0_i32 = arith.constant 0 : i32
    %c0_i32_0 = arith.constant 0 : i32
    return %arg0, %c0_i32 : i32, i32
  }
}

</mosaic_0001>

<llo_original>
// kernel: tpu_custom_call.1
$region0: #{tpu_custom_call.1}
  #allocation0 [shape = 'u32[]', space=smem, size = 0x4, offset = 0x4, fixed_abs, tag = 'smem constant byte address 0x4 - core index']
  #allocation1 [shape = 'u32[144,128]{1,0:T(1,128)}', space=vmem, size = 0x12000, scoped, tag = 'internal scratch']
  %s0 = inlined_call_operand.hbm [shape: f32[16,32], index: 0, kind: input, shape index: {}]
  %s1 = inlined_call_operand.hbm [shape: f32[16,32], index: 1, kind: input, shape index: {}]
  %s2 = inlined_call_operand.vmem [shape: f32[1,32], index: 2, kind: input, shape index: {}]
  %s3 = inlined_call_operand.hbm [shape: f32[16,32], index: 3, kind: output, shape index: {}]
  %s4 = sld [smem:[#allocation0]]
  $region53: #{tpu_custom_call.1} parent=0
    _
  %s6 = ssub.s32 1, %s4
  %s7 = scalar_select 0, %s6, %s4
  $region1: #{tpu_custom_call.1} parent=0
    #allocation2 [shape = 'u8[8192]{0}', space=vmem, size = 0x2000, scoped, tag = 'input window, operand 0']
    #allocation3 [shape = 's32[2]{0}', space=sflag, size = 0x8, scoped, tag = 'scoped memory for tpu_custom_call.1']
    #allocation4 [shape = 's32[2]{0}', space=sflag, size = 0x8, scoped, tag = 'scoped memory for tpu_custom_call.1']
    #allocation5 [shape = 'u8[8192]{0}', space=vmem, size = 0x2000, scoped, tag = 'input window, operand 1']
    #allocation6 [shape = 's32[2]{0}', space=sflag, size = 0x8, scoped, tag = 'scoped memory for tpu_custom_call.1']
    #allocation7 [shape = 'u8[8192]{0}', space=vmem, size = 0x2000, scoped, tag = 'output window, operand 0']
    %8 = vsyncpa [#allocation3], 0
    %s9 = scalar_lea.sflag [#allocation3], 1
    %10 = vsyncpa %s9, 0
    %11 = vsyncpa [#allocation6], 0
    %s12 = scalar_lea.sflag [#allocation6], 1
    %13 = vsyncpa %s12, 0
    %14 = vsyncpa [#allocation4], 0
    %s15 = scalar_lea.sflag [#allocation4], 1
    %16 = vsyncpa %s15, 0
    loop: start=0, step=1, limit=4
    $region2: #{tpu_custom_call.1} parent=1 // loop_pre_header
      _
    $region3: #{tpu_custom_call.1} parent=1 // loop_header
      %s18 = sphi 0, %s22
      %p19 = scmp.ge.s32.totalorder %s18, 4
      %s28 = sphi 0, %s30
      %s31 = sphi 0, %s28
      %s32 = sphi 0, %s31
      %s48 = sphi 0, %s32
      %s54 = sphi 0, %s56
      %s57 = sphi 0, %s54
      %s58 = sphi 0, %s57
      %s74 = sphi 0, %s58
      %s78 = sphi 0, %s78
      %s80 = sphi 0, %s78
      %s81 = sphi 0, %s80
      %s95 = sphi 0, %s81
      %s101 = sphi 0, %s103
      %s104 = sphi 0, %s101
      %s105 = sphi 0, %s104
      %s121 = sphi 0, %s105
    $region4: #{tpu_custom_call.1} parent=1 // loop_header_branch
      %21 = sbr.rel (%p19) target = $region8
    $region5: #{tpu_custom_call.1} parent=1 // loop_body
      %s23 = ssub.s32 %s18, 1
      %s24 = ssub.s32 %s18, 2
      %s25 = sadd.s32 %s18, 1
      %s26 = ssub.s32 %s18, %s25
      %p27 = scmp.eq.s32.totalorder %s26, 0
      %s29 = sadd.s32 %s28, 1
      %s30 = scalar_select %p27, %s28, %s29
      %p33 = pneg %p27
      %p34 = scmp.eq.s32.totalorder %s18, 1
      %p35 = por %p33, %p34
      %p36 = scmp.ne.s32.totalorder %s28, %s31
      %p37 = scmp.eq.s32.totalorder %s18, 0
      %p38 = por %p36, %p37
      %p39 = scmp.ne.s32.totalorder %s28, %s31
      %p40 = scmp.eq.s32.totalorder %s23, 1
      %p41 = por %p39, %p40
      %p42 = scmp.ne.s32.totalorder %s31, %s32
      %p43 = scmp.eq.s32.totalorder %s23, 0
      %p44 = por %p42, %p43
      %p45 = scmp.ne.s32.totalorder %s31, %s32
      %p46 = scmp.eq.s32.totalorder %s24, 1
      %p47 = por %p45, %p46
      %p49 = scmp.ne.s32.totalorder %s32, %s48
      %p50 = scmp.eq.s32.totalorder %s24, 0
      %p51 = por %p49, %p50
      %s52 = ssub.s32 %s18, %s25
      %p53 = scmp.eq.s32.totalorder %s52, 0
      %s55 = sadd.s32 %s54, 1
      %s56 = scalar_select %p53, %s54, %s55
      %p59 = pneg %p53
      %p60 = scmp.eq.s32.totalorder %s18, 1
      %p61 = por %p59, %p60
      %p62 = scmp.ne.s32.totalorder %s54, %s57
      %p63 = scmp.eq.s32.totalorder %s18, 0
      %p64 = por %p62, %p63
      %p65 = scmp.ne.s32.totalorder %s54, %s57
      %p66 = scmp.eq.s32.totalorder %s23, 1
      %p67 = por %p65, %p66
      %p68 = scmp.ne.s32.totalorder %s57, %s58
      %p69 = scmp.eq.s32.totalorder %s23, 0
      %p70 = por %p68, %p69
      %p71 = scmp.ne.s32.totalorder %s57, %s58
      %p72 = scmp.eq.s32.totalorder %s24, 1
      %p73 = por %p71, %p72
      %p75 = scmp.ne.s32.totalorder %s58, %s74
      %p76 = scmp.eq.s32.totalorder %s24, 0
      %p77 = por %p75, %p76
      %s79 = sadd.s32 %s78, 1
      %p82 = scmp.eq.s32.totalorder %s18, 1
      %p83 = scmp.ne.s32.totalorder %s78, %s80
      %p84 = scmp.eq.s32.totalorder %s18, 0
      %p85 = por %p83, %p84
      %p86 = scmp.ne.s32.totalorder %s78, %s80
      %p87 = scmp.eq.s32.totalorder %s23, 1
      %p88 = por %p86, %p87
      %p89 = scmp.ne.s32.totalorder %s80, %s81
      %p90 = scmp.eq.s32.totalorder %s23, 0
      %p91 = por %p89, %p90
      %p92 = scmp.ne.s32.totalorder %s80, %s81
      %p93 = scmp.eq.s32.totalorder %s24, 1
      %p94 = por %p92, %p93
      %p96 = scmp.ne.s32.totalorder %s81, %s95
      %p97 = scmp.eq.s32.totalorder %s24, 0
      %p98 = por %p96, %p97
      %s99 = ssub.s32 %s18, %s25
      %p100 = scmp.eq.s32.totalorder %s99, 0
      %s102 = sadd.s32 %s101, 1
      %s103 = scalar_select %p100, %s101, %s102
      %p106 = pneg %p100
      %p107 = scmp.eq.s32.totalorder %s18, 1
      %p108 = por %p106, %p107
      %p109 = scmp.ne.s32.totalorder %s101, %s104
      %p110 = scmp.eq.s32.totalorder %s18, 0
      %p111 = por %p109, %p110
      %p112 = scmp.ne.s32.totalorder %s101, %s104
      %p113 = scmp.eq.s32.totalorder %s23, 1
      %p114 = por %p112, %p113
      %p115 = scmp.ne.s32.totalorder %s104, %s105
      %p116 = scmp.eq.s32.totalorder %s23, 0
      %p117 = por %p115, %p116
      %p118 = scmp.ne.s32.totalorder %s104, %s105
      %p119 = scmp.eq.s32.totalorder %s24, 1
      %p120 = por %p118, %p119
      %p122 = scmp.ne.s32.totalorder %s105, %s121
      %p123 = scmp.eq.s32.totalorder %s24, 0
      %p124 = por %p122, %p123
      %p125 = scmp.le.s32.totalorder 1, %s18
      %p126 = scmp.lt.s32.totalorder %s18, 3
      %p127 = pnand %p125, %p126
      %p128 = pneg %p127
      // Predicated region
      $region9: #{tpu_custom_call.1} parent=5 // pred_check
        _
      $region10: #{tpu_custom_call.1} parent=5 // pred_check_branch
        %130 = sbr.rel (%p127) target = $region12
      $region11: #{tpu_custom_call.1} parent=5 // pred_region
        %s131 = ssub.s32 %s18, 1
        // Predicated region
        $region13: #{tpu_custom_call.1} parent=11 // pred_check
          %p132 = pneg %p91
        $region14: #{tpu_custom_call.1} parent=11 // pred_check_branch
          %134 = sbr.rel (%p132) target = $region16
        $region15: #{tpu_custom_call.1} parent=11 // pred_region
          _
        $region16: #{tpu_custom_call.1} parent=11 // pred_fallthru
          _
      $region12: #{tpu_custom_call.1} parent=5 // pred_fallthru
        _
      %p135 = scmp.lt.s32.totalorder %s18, 2
      // Predicated region
      $region17: #{tpu_custom_call.1} parent=5 // pred_check
        %p136 = pneg %p135
      $region18: #{tpu_custom_call.1} parent=5 // pred_check_branch
        %138 = sbr.rel (%p136) target = $region20
      $region19: #{tpu_custom_call.1} parent=5 // pred_region
        // Predicated region
        $region21: #{tpu_custom_call.1} parent=19 // pred_check
          %p139 = pneg %p38
        $region22: #{tpu_custom_call.1} parent=19 // pred_check_branch
          %141 = sbr.rel (%p139) target = $region24
        $region23: #{tpu_custom_call.1} parent=19 // pred_region
          %s142 = sand.u32 %s28, 1
          %s143 = scalar_lea.sflag [#allocation3], %s142
          %s144 = sand.u32 %s28, 1
          %s145 = smul.addr %s144, 8
          %s146 = scalar_lea.vmem [#allocation2], %s145
          %s148 = ssub.s32 128, 128
          %149 = vsyncadd %s143, %s148
          %s150 = smul.addr %s18, 128
          %s151 = scalar_lea.hbm %s0, %s150
          %s153 = sshll.u32 %s146, 4
          %s154 = int_to_ptr.vmem [resolvable:$true] %s153
          %156 = dma.hbm_to_vmem [thread:$0]  %s151, 128, %s154, %s143
        $region24: #{tpu_custom_call.1} parent=19 // pred_fallthru
          _
        // Predicated region
        $region25: #{tpu_custom_call.1} parent=19 // pred_check
          %p157 = pneg %p64
        $region26: #{tpu_custom_call.1} parent=19 // pred_check_branch
          %159 = sbr.rel (%p157) target = $region28
        $region27: #{tpu_custom_call.1} parent=19 // pred_region
          %s160 = sand.u32 %s54, 1
          %s161 = scalar_lea.sflag [#allocation6], %s160
          %s162 = sand.u32 %s54, 1
          %s163 = smul.addr %s162, 8
          %s164 = scalar_lea.vmem [#allocation5], %s163
          %s166 = ssub.s32 128, 128
          %167 = vsyncadd %s161, %s166
          %s168 = smul.addr %s18, 128
          %s169 = scalar_lea.hbm %s1, %s168
          %s171 = sshll.u32 %s164, 4
          %s172 = int_to_ptr.vmem [resolvable:$true] %s171
          %174 = dma.hbm_to_vmem [thread:$0]  %s169, 128, %s172, %s161
        $region28: #{tpu_custom_call.1} parent=19 // pred_fallthru
          _
      $region20: #{tpu_custom_call.1} parent=5 // pred_fallthru
        _
      %p175 = scmp.le.s32.totalorder 1, %s18
      %p176 = scmp.lt.s32.totalorder %s18, 3
      %p177 = pnand %p175, %p176
      %p178 = pneg %p177
      // Predicated region
      $region29: #{tpu_custom_call.1} parent=5 // pred_check
        _
      $region30: #{tpu_custom_call.1} parent=5 // pred_check_branch
        %180 = sbr.rel (%p177) target = $region32
      $region31: #{tpu_custom_call.1} parent=5 // pred_region
        %s181 = ssub.s32 %s18, 1
        %s182 = sand.u32 %s31, 1
        %s183 = scalar_lea.sflag [#allocation3], %s182
        %s184 = sand.u32 %s31, 1
        %s185 = smul.addr %s184, 8
        %s186 = scalar_lea.vmem [#allocation2], %s185
        // Predicated region
        $region33: #{tpu_custom_call.1} parent=31 // pred_check
          %p187 = pneg %p44
        $region34: #{tpu_custom_call.1} parent=31 // pred_check_branch
          %189 = sbr.rel (%p187) target = $region36
        $region35: #{tpu_custom_call.1} parent=31 // pred_region
          %190 = dma.done %s183, 128
        $region36: #{tpu_custom_call.1} parent=31 // pred_fallthru
          _
        %s191 = sand.u32 %s57, 1
        %s192 = scalar_lea.sflag [#allocation6], %s191
        %s193 = sand.u32 %s57, 1
        %s194 = smul.addr %s193, 8
        %s195 = scalar_lea.vmem [#allocation5], %s194
        // Predicated region
        $region37: #{tpu_custom_call.1} parent=31 // pred_check
          %p196 = pneg %p70
        $region38: #{tpu_custom_call.1} parent=31 // pred_check_branch
          %198 = sbr.rel (%p196) target = $region40
        $region39: #{tpu_custom_call.1} parent=31 // pred_region
          %199 = dma.done %s192, 128
        $region40: #{tpu_custom_call.1} parent=31 // pred_fallthru
          _
        %s200 = sand.u32 %s31, 1
        %s201 = scalar_lea.sflag [#allocation3], %s200
        %s202 = sand.u32 %s31, 1
        %s203 = smul.addr %s202, 8
        %s204 = scalar_lea.vmem [#allocation2], %s203
        %p205 = pneg %p44
        %p206 = pneg %p41
        %s207 = sand.u32 %s57, 1
        %s208 = scalar_lea.sflag [#allocation6], %s207
        %s209 = sand.u32 %s57, 1
        %s210 = smul.addr %s209, 8
        %s211 = scalar_lea.vmem [#allocation5], %s210
        %p212 = pneg %p70
        %p213 = pneg %p67
        %p214 = pneg %p91
        %p215 = pneg %p88
        %p216 = pneg %p117
        %p217 = pneg %p114
        %s218 = sand.u32 %s104, 1
        %s219 = scalar_lea.sflag [#allocation4], %s218
        %s220 = sand.u32 %s104, 1
        %s221 = smul.addr %s220, 8
        %s222 = scalar_lea.vmem [#allocation7], %s221
        %v223 = vld [vmem:[%s186] sm:$0xff]
        %v224 = vld [vmem:[%s195] sm:$0xff]
        %v225 = vxor.u32 %v224, 2147483648
        %v226 = vmul.f32 %v225, 1.442695
        %v227 = vpow.pop %v226
        %v228 = vadd.f32 %v227, 1.0
        %v229 = vrcp.pop %v228
        %v230 = vmul.f32 1.0, %v229
        %v231 = vmul.f32 %v224, %v230
        %v232 = vmul.f32 %v223, %v231
        %234 = vrot.lane.b32.xlu0 %v232, 112
        %v235 = vpop.permute.xlu0 %234
        %v237 = vcombine.high %v232, 0.0
        %v239 = vunpack.c.l.s4 1983009808
        %v240 = vunpack.c.0.s8 %v239
        %v241 = vlaneseq
        %v242 = vshrl.u32 %v241, 7
        %v243 = vsub.s32 %v240, %v242
        %v244 = vrot.slane %v232, %v243
        %v246 = vunpack.c.l.s4 1983009808
        %v247 = vunpack.c.0.s8 %v246
        %v248 = vlaneseq
        %v249 = vshrl.u32 %v248, 7
        %v250 = vsub.s32 %v247, %v249
        %v251 = vrot.slane %v237, %v250
        %v252 = vcombine.high %v235, 0.0
        %v254 = vunpack.c.l.s4 1983009808
        %v255 = vunpack.c.0.s8 %v254
        %v256 = vlaneseq
        %v257 = vshrl.u32 %v256, 7
        %v258 = vsub.s32 %v255, %v257
        %v259 = vrot.slane %v235, %v258
        %v261 = vunpack.c.l.s4 1983009808
        %v262 = vunpack.c.0.s8 %v261
        %v263 = vlaneseq
        %v264 = vshrl.u32 %v263, 7
        %v265 = vsub.s32 %v262, %v264
        %v266 = vrot.slane %v252, %v265
        %v267 = vcombine.low %v244, %v259
        %v268 = vcombine.high %v244, %v259
        %v270 = vunpack.c.l.s4 1934713408
        %v271 = vunpack.c.0.s8 %v270
        %v272 = vlaneseq
        %v273 = vshrl.u32 %v272, 7
        %v274 = vsub.s32 %v271, %v273
        %v275 = vrot.slane %v267, %v274
        %v277 = vunpack.c.l.s4 1934713408
        %v278 = vunpack.c.0.s8 %v277
        %v279 = vlaneseq
        %v280 = vshrl.u32 %v279, 7
        %v281 = vsub.s32 %v278, %v280
        %v282 = vrot.slane %v268, %v281
        %v283 = vcombine.low %v251, %v266
        %v284 = vcombine.high %v251, %v266
        %v286 = vunpack.c.l.s4 1934713408
        %v287 = vunpack.c.0.s8 %v286
        %v288 = vlaneseq
        %v289 = vshrl.u32 %v288, 7
        %v290 = vsub.s32 %v287, %v289
        %v291 = vrot.slane %v283, %v290
        %v293 = vunpack.c.l.s4 1934713408
        %v294 = vunpack.c.0.s8 %v293
        %v295 = vlaneseq
        %v296 = vshrl.u32 %v295, 7
        %v297 = vsub.s32 %v294, %v296
        %v298 = vrot.slane %v284, %v297
        %v299 = vcombine.high %v275, 0.0
        %v300 = vcombine.high %v282, 0.0
        %v301 = vcombine.high %v291, 0.0
        %v302 = vcombine.high %v298, 0.0
        %v303 = vmul.f32 %v275, %v275
        %v304 = vmul.f32 %v299, %v299
        %v305 = vmul.f32 %v282, %v282
        %v306 = vmul.f32 %v300, %v300
        %v307 = vmul.f32 %v291, %v291
        %v308 = vmul.f32 %v301, %v301
        %v309 = vmul.f32 %v298, %v298
        %v310 = vmul.f32 %v302, %v302
        %vm311 = vcmask 123904
        %v312 = vsel %vm311, %v303, 0.0
        %313 = vadd.xlane.f32.xlu0 %v312
        %v314 = vpop.xlane.xlu0 %313
        %v315 = vsel %vm311, %v304, 0.0
        %316 = vadd.xlane.f32.xlu0 %v315
        %v317 = vpop.xlane.xlu0 %316
        %v318 = vsel %vm311, %v305, 0.0
        %319 = vadd.xlane.f32.xlu0 %v318
        %v320 = vpop.xlane.xlu0 %319
        %v321 = vsel %vm311, %v306, 0.0
        %322 = vadd.xlane.f32.xlu0 %v321
        %v323 = vpop.xlane.xlu0 %322
        %v324 = vsel %vm311, %v307, 0.0
        %325 = vadd.xlane.f32.xlu0 %v324
        %v326 = vpop.xlane.xlu0 %325
        %v327 = vsel %vm311, %v308, 0.0
        %328 = vadd.xlane.f32.xlu0 %v327
        %v329 = vpop.xlane.xlu0 %328
        %v330 = vsel %vm311, %v309, 0.0
        %331 = vadd.xlane.f32.xlu0 %v330
        %v332 = vpop.xlane.xlu0 %331
        %v333 = vsel %vm311, %v310, 0.0
        %334 = vadd.xlane.f32.xlu0 %v333
        %v335 = vpop.xlane.xlu0 %334
        %v336 = vrcp.pop 16.0
        %v337 = vmul.f32 %v314, %v336
        %v338 = vmul.f32 %v317, %v336
        %v339 = vmul.f32 %v320, %v336
        %v340 = vmul.f32 %v323, %v336
        %v341 = vmul.f32 %v326, %v336
        %v342 = vmul.f32 %v329, %v336
        %v343 = vmul.f32 %v332, %v336
        %v344 = vmul.f32 %v335, %v336
        %v345 = vadd.f32 %v337, 1e-06
        %v346 = vadd.f32 %v338, 1e-06
        %v347 = vadd.f32 %v339, 1e-06
        %v348 = vadd.f32 %v340, 1e-06
        %v349 = vadd.f32 %v341, 1e-06
        %v350 = vadd.f32 %v342, 1e-06
        %v351 = vadd.f32 %v343, 1e-06
        %v352 = vadd.f32 %v344, 1e-06
        %v353 = vrsqrt.pop %v345
        %v354 = vrsqrt.pop %v346
        %v355 = vrsqrt.pop %v347
        %v356 = vrsqrt.pop %v348
        %v357 = vrsqrt.pop %v349
        %v358 = vrsqrt.pop %v350
        %v359 = vrsqrt.pop %v351
        %v360 = vrsqrt.pop %v352
        %v361 = vmul.f32 %v275, %v353
        %v362 = vmul.f32 %v299, %v354
        %v363 = vmul.f32 %v282, %v355
        %v364 = vmul.f32 %v300, %v356
        %v365 = vmul.f32 %v291, %v357
        %v366 = vmul.f32 %v301, %v358
        %v367 = vmul.f32 %v298, %v359
        %v368 = vmul.f32 %v302, %v360
        %v369 = vcombine.low %v361, %v363
        %v371 = vunpack.c.l.s4 1983009808
        %v372 = vunpack.c.0.s8 %v371
        %v373 = vlaneseq
        %v374 = vshrl.u32 %v373, 7
        %v375 = vsub.s32 %v372, %v374
        %v376 = vrot.slane %v369, %v375
        %v377 = vcombine.low %v362, %v364
        %v379 = vunpack.c.l.s4 1983009808
        %v380 = vunpack.c.0.s8 %v379
        %v381 = vlaneseq
        %v382 = vshrl.u32 %v381, 7
        %v383 = vsub.s32 %v380, %v382
        %v384 = vrot.slane %v377, %v383
        %v385 = vcombine.low %v365, %v367
        %v387 = vunpack.c.l.s4 1983009808
        %v388 = vunpack.c.0.s8 %v387
        %v389 = vlaneseq
        %v390 = vshrl.u32 %v389, 7
        %v391 = vsub.s32 %v388, %v390
        %v392 = vrot.slane %v385, %v391
        %v393 = vcombine.low %v366, %v368
        %v395 = vunpack.c.l.s4 1983009808
        %v396 = vunpack.c.0.s8 %v395
        %v397 = vlaneseq
        %v398 = vshrl.u32 %v397, 7
        %v399 = vsub.s32 %v396, %v398
        %v400 = vrot.slane %v393, %v399
        %v401 = vcombine.low %v376, %v384
        %v403 = vunpack.c.l.s4 1934713408
        %v404 = vunpack.c.0.s8 %v403
        %v405 = vlaneseq
        %v406 = vshrl.u32 %v405, 7
        %v407 = vsub.s32 %v404, %v406
        %v408 = vrot.slane %v401, %v407
        %v409 = vcombine.low %v392, %v400
        %v411 = vunpack.c.l.s4 1934713408
        %v412 = vunpack.c.0.s8 %v411
        %v413 = vlaneseq
        %v414 = vshrl.u32 %v413, 7
        %v415 = vsub.s32 %v412, %v414
        %v416 = vrot.slane %v409, %v415
        %v417 = vcombine.low %v408, %v416
        %v418 = vcombine.high %v408, %v416
        %420 = vrot.lane.b32.xlu0 %v418, 16
        %v421 = vpop.permute.xlu0 %420
        %vm423 = vcmask 130048
        %v424 = vsel %vm423, %v417, %v421
        %v425 = vld [vmem:[%s2] sm:$0x1]
        %v427 = vlaneseq
        %v428 = vshrl.u32 %v427, 7
        %v429 = vsub.s32 0, %v428
        %v430 = vrot.slane %v425, %v429
        %v432 = vmul.f32 %v430, %v424
        %vm433 = vcmask 261120
        %434 = vst.msk [vmem:[%s222] sm:$0xff] %vm433, %v432
        %s435 = sand.u32 %s104, 1
        %s436 = scalar_lea.sflag [#allocation4], %s435
        %s437 = sand.u32 %s104, 1
        %s438 = smul.addr %s437, 8
        %s439 = scalar_lea.vmem [#allocation7], %s438
        // Predicated region
        $region41: #{tpu_custom_call.1} parent=31 // pred_check
          %p440 = pneg %p114
        $region42: #{tpu_custom_call.1} parent=31 // pred_check_branch
          %442 = sbr.rel (%p440) target = $region44
        $region43: #{tpu_custom_call.1} parent=31 // pred_region
          %s444 = ssub.s32 128, 128
          %445 = vsyncadd %s436, %s444
          %s446 = smul.addr %s23, 128
          %s447 = scalar_lea.hbm %s3, %s446
          %s449 = sshll.u32 %s439, 4
          %s450 = int_to_ptr.vmem [resolvable:$true] %s449
          %452 = dma.vmem_to_hbm [thread:$0]  %s450, 128, %s447, %s436
        $region44: #{tpu_custom_call.1} parent=31 // pred_fallthru
          _
      $region32: #{tpu_custom_call.1} parent=5 // pred_fallthru
        _
      %p453 = scmp.le.s32.totalorder 2, %s18
      // Predicated region
      $region45: #{tpu_custom_call.1} parent=5 // pred_check
        %p454 = pneg %p453
      $region46: #{tpu_custom_call.1} parent=5 // pred_check_branch
        %456 = sbr.rel (%p454) target = $region48
      $region47: #{tpu_custom_call.1} parent=5 // pred_region
        %s457 = ssub.s32 %s18, 2
        // Predicated region
        $region49: #{tpu_custom_call.1} parent=47 // pred_check
          %p458 = pneg %p120
        $region50: #{tpu_custom_call.1} parent=47 // pred_check_branch
          %460 = sbr.rel (%p458) target = $region52
        $region51: #{tpu_custom_call.1} parent=47 // pred_region
          %s461 = sand.u32 %s105, 1
          %s462 = scalar_lea.sflag [#allocation4], %s461
          %s463 = sand.u32 %s105, 1
          %s464 = smul.addr %s463, 8
          %s465 = scalar_lea.vmem [#allocation7], %s464
          %466 = dma.done %s462, 128
        $region52: #{tpu_custom_call.1} parent=47 // pred_fallthru
          _
      $region48: #{tpu_custom_call.1} parent=5 // pred_fallthru
        _
    $region6: #{tpu_custom_call.1} parent=1 // loop_footer
      %s22 = sadd.s32 1, %s18
    $region7: #{tpu_custom_call.1} parent=1 // loop_footer_branch
      %17 = sbr.rel target = $region3
    $region8: #{tpu_custom_call.1} parent=1 // loop_exit
      _
    %467 = vsyncpa [#allocation3], 1
    %s468 = scalar_lea.sflag [#allocation3], 1
    %469 = vsyncpa %s468, 1
    %470 = vsyncpa [#allocation6], 1
    %s471 = scalar_lea.sflag [#allocation6], 1
    %472 = vsyncpa %s471, 1
    %473 = vsyncpa [#allocation4], 1
    %s474 = scalar_lea.sflag [#allocation4], 1
    %475 = vsyncpa %s474, 1

</llo_original>
